<compile_context>
chip_gen: v5e
topology: v5e:2x2
jax: 0.10.0
libtpu: 0.0.40
codegen_flags: <defaults>
</compile_context>

<pallas_src>
import functools

import jax
import jax.numpy as jnp
from jax import lax
from jax.experimental import pallas as pl
from jax.experimental.pallas import tpu as pltpu


# ---------------------------------------------------------------------------
# in-kernel helpers
# ---------------------------------------------------------------------------

def _conv_from_lhs(lhs0, lhs1, w_ref, fuse_k):
    """f32 conv accumulator from the two row-parity LHS operands.

    fuse_k=True : w_ref is (2*K8, Coutp); lane-concat the parity operands so
                  the MXU sees one matmul with K = Cin*16 (small-Cin layers).
    fuse_k=False: w_ref is (2, K8, Coutp); two matmuls + one f32 add.
    """
    if fuse_k:
        lhs = jnp.concatenate([lhs0, lhs1], axis=-1)
        return jnp.dot(lhs, w_ref[...], preferred_element_type=jnp.float32)
    acc = jnp.dot(lhs0, w_ref[0], preferred_element_type=jnp.float32)
    return acc + jnp.dot(lhs1, w_ref[1], preferred_element_type=jnp.float32)


def _leaky_relu(y, negative_slope):
    return jnp.where(y > 0, y, negative_slope * y)


# --- whole-sample kernels (grid = (N,)) ------------------------------------

def _whole_norm_kernel(xu_ref, w_ref, o_ref, *, row_shift, num_out, fuse_k,
                       eps, negative_slope):
    # No bias: a per-channel constant added before InstanceNorm cancels in the
    # mean subtraction, so both the add and the bias DMA are dead work.
    p = num_out
    lhs0 = xu_ref[0, pl.ds(0, p), :]
    lhs1 = xu_ref[0, pl.ds(row_shift, p), :]
    y = _conv_from_lhs(lhs0, lhs1, w_ref, fuse_k)            # (P, Coutp) f32

    inv_p = 1.0 / p                                          # one-pass moments
    s = jnp.sum(y, axis=0, keepdims=True)
    ss = jnp.sum(y * y, axis=0, keepdims=True)
    mean = s * inv_p
    var = jnp.maximum(ss * inv_p - mean * mean, 0.0)
    y = (y - mean) * lax.rsqrt(var + eps)
    o_ref[0] = _leaky_relu(y, negative_slope).astype(o_ref.dtype)


def _whole_nonorm_kernel(xu_ref, w_ref, b_ref, o_ref, *, row_shift, num_out,
                         fuse_k, negative_slope):
    p = num_out
    lhs0 = xu_ref[0, pl.ds(0, p), :]
    lhs1 = xu_ref[0, pl.ds(row_shift, p), :]
    y = _conv_from_lhs(lhs0, lhs1, w_ref, fuse_k) + b_ref[...]
    o_ref[0] = _leaky_relu(y, negative_slope).astype(o_ref.dtype)


# --- spatially-tiled kernels (grid = (N, T), T output-row tiles) ------------

def _tile_lhs(xt_ref, hl_ref, ow):
    lhs0 = xt_ref[0]                                         # (TP, K8)
    # parity-1 rows = tile rows shifted by one output row (OW) + one-row halo.
    lhs1 = jnp.concatenate([lhs0[ow:], hl_ref[0]], axis=0)
    return lhs0, lhs1


def _tiled_stats_kernel(xt_ref, hl_ref, w_ref, st_ref, *, ow, fuse_k):
    lhs0, lhs1 = _tile_lhs(xt_ref, hl_ref, ow)
    y = _conv_from_lhs(lhs0, lhs1, w_ref, fuse_k)            # (TP, Coutp) f32
    st_ref[0, 0] = jnp.concatenate(
        [jnp.sum(y, axis=0, keepdims=True),
         jnp.sum(y * y, axis=0, keepdims=True)], axis=0)     # (2, Coutp)


def _tiled_norm_kernel(xt_ref, hl_ref, w_ref, st_ref, o_ref, *, ow, fuse_k,
                       inv_p, eps, negative_slope):
    lhs0, lhs1 = _tile_lhs(xt_ref, hl_ref, ow)
    y = _conv_from_lhs(lhs0, lhs1, w_ref, fuse_k)
    st = st_ref[0]                                           # (2, Coutp) f32
    mean = st[0:1] * inv_p
    var = jnp.maximum(st[1:2] * inv_p - mean * mean, 0.0)
    y = (y - mean) * lax.rsqrt(var + eps)
    o_ref[0] = _leaky_relu(y, negative_slope).astype(o_ref.dtype)


def _tiled_nonorm_kernel(xt_ref, hl_ref, w_ref, b_ref, o_ref, *, ow, fuse_k,
                         negative_slope):
    lhs0, lhs1 = _tile_lhs(xt_ref, hl_ref, ow)
    y = _conv_from_lhs(lhs0, lhs1, w_ref, fuse_k) + b_ref[...]
    o_ref[0] = _leaky_relu(y, negative_slope).astype(o_ref.dtype)


# ---------------------------------------------------------------------------
# host-side helpers
# ---------------------------------------------------------------------------

def _round_up(v, m):
    return (v + m - 1) // m * m


def _itemsize(dt):
    return jnp.dtype(dt).itemsize


def _vmem_limit_bytes():
    try:
        cap = int(pltpu.get_tpu_info().vmem_capacity_bytes)
    except Exception:
        cap = 64 * 1024 * 1024                 # conservative (v7x per-core)
    return max(32 * 1024 * 1024, (cap * 3) // 4)


def _whole_footprint(ru, p, k8, coutp, mm_dtype, out_dtype, fuse_k):
    mm, ob = _itemsize(mm_dtype), _itemsize(out_dtype)
    lhs_tmp = p * 2 * k8 * mm if fuse_k else p * coutp * 4
    return (2 * ru * k8 * mm               # double-buffered xu block
            + 2 * p * coutp * ob           # double-buffered output block
            + p * coutp * 4                # f32 accumulator / epilogue temp
            + lhs_tmp
            + 2 * 2 * k8 * coutp * mm)     # weights


def _tile_footprint(tp, ow, k8, coutp, mm_dtype, out_dtype, fuse_k):
    mm, ob = _itemsize(mm_dtype), _itemsize(out_dtype)
    lhs_tmp = tp * k8 * mm * (3 if fuse_k else 1)
    return (2 * (tp + ow) * k8 * mm
            + 2 * tp * coutp * ob
            + 2 * tp * coutp * 4
            + lhs_tmp
            + 2 * 2 * k8 * coutp * mm)


# ---------------------------------------------------------------------------
# public entry point
# ---------------------------------------------------------------------------

def downsample_forward(x, weight, bias, *, stride=2, padding=1,
                       apply_instancenorm=True, eps=1e-5, negative_slope=0.2,
                       use_bf16=False, channels_last=False, spatial_tiles=None):
    """Forward of the PyTorch `Downsample` module.

    x: (N, Cin, H, W); weight: (Cout, Cin, 4, 4); bias: (Cout,).
    Returns NCHW (N, Cout, OH, OW), or NHWC if channels_last=True.

    use_bf16: bf16 matmul operands (f32 accumulate + f32 epilogue); halves the
        dominant HBM stream / VMEM on v5e/v6e/v7x.  Silently stays in f32 when
        OW % 16 != 0 (keeps the shifted LHS slice sublane-aligned).
    spatial_tiles: force the tiled two-pass path (must divide OH, OW % 8 == 0).
        Chosen automatically when the whole-sample block would not fit VMEM;
        also useful on v7x at N == 1 so both TensorCores get work.
    """
    N, Cin, H, W = x.shape
    Cout, Cin_w, KH, KW = weight.shape
    assert Cin == Cin_w
    assert (KH, KW, stride, padding) == (4, 4, 2, 1), (
        "kernel is specialized to the Downsample defaults k=4, s=2, p=1")
    assert H % 2 == 0 and W % 2 == 0
    OH, OW = H // 2, W // 2
    P = OH * OW
    K8 = Cin * 8
    RU = (OH + 1) * OW
    Coutp = _round_up(Cout, 128)
    out_dtype = x.dtype

    mm_dtype = jnp.bfloat16 if (use_bf16 and OW % 16 == 0) else x.dtype
    fuse_k = K8 <= 128   # single fused-K matmul for small Cin

    # --- unfold (cast FIRST so the transpose / HBM write moves mm_dtype):
    #   xu[n, r*OW + c, ci*8 + p*4 + q] = x_pad[n, ci, 2r + p, 2c + q]
    x_pad = jnp.pad(x.astype(mm_dtype),
                    ((0, 0), (0, 0), (padding, padding), (padding, padding)))
    xr = x_pad.reshape(N, Cin, OH + 1, 2, W + 2)
    parts = [xr[..., q:q + 2 * OW:2] for q in range(4)]      # (N,Cin,OH+1,2,OW)
    xu = jnp.stack(parts, axis=-1)                           # (N,Cin,OH+1,2,OW,4)
    xu = xu.transpose(0, 2, 4, 1, 3, 5).reshape(N, RU, K8)   # (N,(OH+1)*OW,Cin*8)

    # weights: w_mat[a, ci*8 + p*4 + q, co] = weight[co, ci, 2a + p, q]
    w_mat = weight.reshape(Cout, Cin, 2, 2, 4).transpose(2, 1, 3, 4, 0)
    w_mat = w_mat.reshape(2, K8, Cout)
    w_mat = jnp.pad(w_mat, ((0, 0), (0, 0), (0, Coutp - Cout))).astype(mm_dtype)
    if fuse_k:
        w_mat = w_mat.reshape(2 * K8, Coutp)

    # bias only when norm is OFF (cancelled by the mean subtraction otherwise)
    b_mat = None
    if not apply_instancenorm:
        b_mat = jnp.pad(bias.astype(jnp.float32),
                        (0, Coutp - Cout)).reshape(1, Coutp)

    vmem_limit = _vmem_limit_bytes()
    budget = (vmem_limit * 4) // 5

    if spatial_tiles is not None:
        T = int(spatial_tiles)
        assert T >= 1 and OH % T == 0, "spatial_tiles must divide OH"
        assert T == 1 or OW % 8 == 0, "tiled path needs OW % 8 == 0"
    elif (_whole_footprint(RU, P, K8, Coutp, mm_dtype, out_dtype, fuse_k)
          > budget and OW % 8 == 0):
        T = 1
        for t in range(1, OH + 1):
            if OH % t:
                continue
            T = t
            if _tile_footprint((OH // t) * OW, OW, K8, Coutp, mm_dtype,
                               out_dtype, fuse_k) <= budget:
                break
    else:
        T = 1

    if T == 1:
        # -------- whole-sample path: one grid step per sample ---------------
        w_spec = pl.BlockSpec(w_mat.shape,
                              (lambda n: (0, 0)) if fuse_k
                              else (lambda n: (0, 0, 0)))
        cparams = pltpu.CompilerParams(dimension_semantics=("parallel",),
                                       vmem_limit_bytes=vmem_limit)
        if apply_instancenorm:
            kernel = functools.partial(
                _whole_norm_kernel, row_shift=OW, num_out=P, fuse_k=fuse_k,
                eps=eps, negative_slope=negative_slope)
            in_specs = [pl.BlockSpec((1, RU, K8), lambda n: (n, 0, 0)), w_spec]
            args = (xu, w_mat)
        else:
            kernel = functools.partial(
                _whole_nonorm_kernel, row_shift=OW, num_out=P, fuse_k=fuse_k,
                negative_slope=negative_slope)
            in_specs = [pl.BlockSpec((1, RU, K8), lambda n: (n, 0, 0)), w_spec,
                        pl.BlockSpec((1, Coutp), lambda n: (0, 0))]
            args = (xu, w_mat, b_mat)
        out = pl.pallas_call(
            kernel,
            out_shape=jax.ShapeDtypeStruct((N, P, Coutp), out_dtype),
            grid_spec=pltpu.PrefetchScalarGridSpec(
                num_scalar_prefetch=0, grid=(N,),
                in_specs=in_specs,
                out_specs=pl.BlockSpec((1, P, Coutp), lambda n: (n, 0, 0))),
            compiler_params=cparams,
        )(*args)
    else:
        # -------- spatially tiled path: grid = (N, T), both parallel --------
        TR = OH // T                     # output rows per tile
        TP = TR * OW                     # output pixels per tile
        w_idx = (lambda n, t: (0, 0)) if fuse_k else (lambda n, t: (0, 0, 0))
        w_spec = pl.BlockSpec(w_mat.shape, w_idx)
        xt_spec = pl.BlockSpec((1, TP, K8), lambda n, t: (n, t, 0))
        # one-row-pair halo (same xu array, tiny extra DMA per tile)
        hl_spec = pl.BlockSpec((1, OW, K8), lambda n, t: (n, (t + 1) * TR, 0))
        out_spec = pl.BlockSpec((1, TP, Coutp), lambda n, t: (n, t, 0))
        cparams = pltpu.CompilerParams(
            dimension_semantics=("parallel", "parallel"),
            vmem_limit_bytes=vmem_limit)

        if apply_instancenorm:
            # pass 1: per-tile conv -> per-tile channel moments
            stats_part = pl.pallas_call(
                functools.partial(_tiled_stats_kernel, ow=OW, fuse_k=fuse_k),
                out_shape=jax.ShapeDtypeStruct((N, T, 2, Coutp), jnp.float32),
                grid_spec=pltpu.PrefetchScalarGridSpec(
                    num_scalar_prefetch=0, grid=(N, T),
                    in_specs=[xt_spec, hl_spec, w_spec],
                    out_specs=pl.BlockSpec((1, 1, 2, Coutp),
                                           lambda n, t: (n, t, 0, 0))),
                compiler_params=cparams,
            )(xu, xu, w_mat)
            stats = jnp.sum(stats_part, axis=1)              # (N, 2, Coutp)

            # pass 2: recompute conv per tile, normalize with full-sample
            # moments, LeakyReLU (recompute avoids a (P,Coutp) f32 HBM round
            # trip; the extra MXU work is hidden under the HBM stream).
            out = pl.pallas_call(
                functools.partial(_tiled_norm_kernel, ow=OW, fuse_k=fuse_k,
                                  inv_p=1.0 / P, eps=eps,
                                  negative_slope=negative_slope),
                out_shape=jax.ShapeDtypeStruct((N, P, Coutp), out_dtype),
                grid_spec=pltpu.PrefetchScalarGridSpec(
                    num_scalar_prefetch=0, grid=(N, T),
                    in_specs=[xt_spec, hl_spec, w_spec,
                              pl.BlockSpec((1, 2, Coutp),
                                           lambda n, t: (n, 0, 0))],
                    out_specs=out_spec),
                compiler_params=cparams,
            )(xu, xu, w_mat, stats)
        else:
            out = pl.pallas_call(
                functools.partial(_tiled_nonorm_kernel, ow=OW, fuse_k=fuse_k,
                                  negative_slope=negative_slope),
                out_shape=jax.ShapeDtypeStruct((N, P, Coutp), out_dtype),
                grid_spec=pltpu.PrefetchScalarGridSpec(
                    num_scalar_prefetch=0, grid=(N, T),
                    in_specs=[xt_spec, hl_spec, w_spec,
                              pl.BlockSpec((1, Coutp), lambda n, t: (0, 0))],
                    out_specs=out_spec),
                compiler_params=cparams,
            )(xu, xu, w_mat, b_mat)

    out = out[:, :, :Cout].reshape(N, OH, OW, Cout)
    if channels_last:
        return out                                 # NHWC: skip NCHW transpose
    return out.transpose(0, 3, 1, 2)


# ---------------------------------------------------------------------------
# pure-JAX reference & tests
# ---------------------------------------------------------------------------

def _reference(x, weight, bias, *, stride=2, padding=1,
               apply_instancenorm=True, eps=1e-5, negative_slope=0.2):
    y = lax.conv_general_dilated(
        x, weight, window_strides=(stride, stride),
        padding=[(padding, padding), (padding, padding)],
        dimension_numbers=("NCHW", "OIHW", "NCHW"))
    y = y + bias[None, :, None, None]
    if apply_instancenorm:
        mean = jnp.mean(y, axis=(2, 3), keepdims=True)
        var = jnp.mean((y - mean) ** 2, axis=(2, 3), keepdims=True)
        y = (y - mean) * lax.rsqrt(var + eps)
    return jnp.where(y > 0, y, negative_slope * y)


if __name__ == "__main__":
    key = jax.random.PRNGKey(0)
    kx, kw, kb = jax.random.split(key, 3)

    # --- 1) f32 whole-sample path, norm on ---------------------------------
    N, Cin, H, W = 2, 4, 16, 16
    Cout = 8
    x = jax.random.normal(kx, (N, Cin, H, W), dtype=jnp.float32)
    weight = 0.1 * jax.random.normal(kw, (Cout, Cin, 4, 4), dtype=jnp.float32)
    bias = 0.1 * jax.random.normal(kb, (Cout,), dtype=jnp.float32)

    out = jax.block_until_ready(downsample_forward(x, weight, bias))
    ref = _reference(x, weight, bias)
    assert out.shape == (N, Cout, H // 2, W // 2), out.shape
    assert jnp.allclose(out, ref, atol=2e-4, rtol=2e-4), \
        float(jnp.max(jnp.abs(out - ref)))

    # --- 2) no-norm branch (exercises the bias path) ------------------------
    out_nn = jax.block_until_ready(
        downsample_forward(x, weight, bias, apply_instancenorm=False))
    ref_nn = _reference(x, weight, bias, apply_instancenorm=False)
    assert jnp.allclose(out_nn, ref_nn, atol=2e-4, rtol=2e-4)

    # --- 3) channels_last output (skips the NCHW transpose) -----------------
    out_cl = jax.block_until_ready(
        downsample_forward(x, weight, bias, channels_last=True))
    assert out_cl.shape == (N, H // 2, W // 2, Cout)
    assert jnp.allclose(out_cl, ref.transpose(0, 2, 3, 1), atol=2e-4, rtol=2e-4)

    # --- 4) forced spatially-tiled two-pass path (norm on and off) ----------
    H2 = W2 = 32
    x2 = jax.random.normal(kx, (N, Cin, H2, W2), dtype=jnp.float32)
    out_t = jax.block_until_ready(
        downsample_forward(x2, weight, bias, spatial_tiles=4))
    ref_t = _reference(x2, weight, bias)
    assert jnp.allclose(out_t, ref_t, atol=5e-4, rtol=5e-4), \
        float(jnp.max(jnp.abs(out_t - ref_t)))

    out_tn = jax.block_until_ready(
        downsample_forward(x2, weight, bias, apply_instancenorm=False,
                           spatial_tiles=4))
    ref_tn = _reference(x2, weight, bias, apply_instancenorm=False)
    assert jnp.allclose(out_tn, ref_tn, atol=5e-4, rtol=5e-4)

    # --- 5) bf16 matmul-operand path (OW % 16 == 0) --------------------------
    out_bf = jax.block_until_ready(
        downsample_forward(x2, weight, bias, use_bf16=True))
    ref_bf = _reference(x2.astype(jnp.bfloat16).astype(jnp.float32),
                        weight.astype(jnp.bfloat16).astype(jnp.float32), bias)
    assert out_bf.shape == (N, Cout, H2 // 2, W2 // 2)
    assert jnp.allclose(out_bf, ref_bf, atol=3e-2, rtol=3e-2), \
        float(jnp.max(jnp.abs(out_bf - ref_bf)))

    # --- 6) non-fused two-matmul path (K8 = Cin*8 > 128) ---------------------
    Cin2 = 20
    x3 = jax.random.normal(kx, (1, Cin2, 16, 16), dtype=jnp.float32)
    w3 = 0.05 * jax.random.normal(kw, (Cout, Cin2, 4, 4), dtype=jnp.float32)
    out3 = jax.block_until_ready(downsample_forward(x3, w3, bias))
    ref3 = _reference(x3, w3, bias)
    assert jnp.allclose(out3, ref3, atol=5e-4, rtol=5e-4), \
        float(jnp.max(jnp.abs(out3 - ref3)))

    print("KERNEL_OK")
</pallas_src>

<mosaic_0001>
module attributes {stable_mosaic.version = 11 : i64} {
  func.func @_whole_norm_kernel(%arg0: i32, %arg1: memref<1x72x32xf32, #tpu.memory_space<vmem>>, %arg2: memref<64x128xf32, #tpu.memory_space<vmem>>, %arg3: memref<1x64x128xf32, #tpu.memory_space<vmem>>) attributes {dimension_semantics = [#tpu.dimension_semantics<parallel>], iteration_bounds = array<i64: 2>, scalar_prefetch = 0 : i64, scratch_operands = 0 : i64, tpu.core_type = #tpu.core_type<tc>, window_params = [{transform_indices = @transform_0, window_bounds = array<i64: 1, 72, 32>}, {pipeline_mode = #tpu.pipeline_mode<synchronous>, transform_indices = @transform_1, window_bounds = array<i64: 64, 128>}, {transform_indices = @transform_2, window_bounds = array<i64: 1, 64, 128>}]} {
    %c0 = arith.constant 0 : index
    %c0_0 = arith.constant 0 : index
    %c0_1 = arith.constant 0 : index
    %0 = vector.load %arg1[%c0, %c0_0, %c0_1] : memref<1x72x32xf32, #tpu.memory_space<vmem>>, vector<1x64x32xf32>
    %1 = vector.shape_cast %0 : vector<1x64x32xf32> to vector<64x32xf32>
    %c0_2 = arith.constant 0 : index
    %c8 = arith.constant 8 : index
    %c0_3 = arith.constant 0 : index
    %2 = vector.load %arg1[%c0_2, %c8, %c0_3] : memref<1x72x32xf32, #tpu.memory_space<vmem>>, vector<1x64x32xf32>
    %3 = vector.shape_cast %2 : vector<1x64x32xf32> to vector<64x32xf32>
    %4 = tpu.concatenate %1, %3 in 1 : vector<64x32xf32>, vector<64x32xf32> -> vector<64x64xf32>
    %c0_4 = arith.constant 0 : index
    %c0_5 = arith.constant 0 : index
    %5 = vector.load %arg2[%c0_4, %c0_5] : memref<64x128xf32, #tpu.memory_space<vmem>>, vector<64x128xf32>
    %cst = arith.constant dense<0.000000e+00> : vector<64x128xf32>
    %6 = tpu.matmul %4, %5, %cst {dimension_numbers = #tpu.dot_dimension_numbers<[1], [0], [0], [1], [0, 0, 1, 1], [], []>} : vector<64x64xf32>, vector<64x128xf32>, vector<64x128xf32> -> vector<64x128xf32>
    %cst_6 = arith.constant dense<0.000000e+00> : vector<128xf32>
    %7 = vector.multi_reduction <add>, %6, %cst_6 [0] : vector<64x128xf32> to vector<128xf32>
    %8 = vector.shape_cast %7 : vector<128xf32> to vector<1x128xf32>
    %9 = arith.mulf %6, %6 : vector<64x128xf32>
    %cst_7 = arith.constant dense<0.000000e+00> : vector<128xf32>
    %10 = vector.multi_reduction <add>, %9, %cst_7 [0] : vector<64x128xf32> to vector<128xf32>
    %11 = vector.shape_cast %10 : vector<128xf32> to vector<1x128xf32>
    %cst_8 = arith.constant 1.562500e-02 : f32
    %12 = vector.broadcast %cst_8 : f32 to vector<1x128xf32>
    %13 = arith.mulf %8, %12 : vector<1x128xf32>
    %cst_9 = arith.constant 1.562500e-02 : f32
    %14 = vector.broadcast %cst_9 : f32 to vector<1x128xf32>
    %15 = arith.mulf %11, %14 : vector<1x128xf32>
    %16 = arith.mulf %13, %13 : vector<1x128xf32>
    %17 = arith.subf %15, %16 : vector<1x128xf32>
    %cst_10 = arith.constant 0.000000e+00 : f32
    %18 = vector.broadcast %cst_10 : f32 to vector<1x128xf32>
    %19 = arith.maximumf %17, %18 : vector<1x128xf32>
    %20 = vector.broadcast %13 : vector<1x128xf32> to vector<64x128xf32>
    %21 = arith.subf %6, %20 : vector<64x128xf32>
    %cst_11 = arith.constant 9.99999974E-6 : f32
    %22 = vector.broadcast %cst_11 : f32 to vector<1x128xf32>
    %23 = arith.addf %19, %22 : vector<1x128xf32>
    %24 = math.rsqrt %23 : vector<1x128xf32>
    %25 = vector.broadcast %24 : vector<1x128xf32> to vector<64x128xf32>
    %26 = arith.mulf %21, %25 : vector<64x128xf32>
    %cst_12 = arith.constant 0.000000e+00 : f32
    %27 = vector.broadcast %cst_12 : f32 to vector<64x128xf32>
    %28 = arith.cmpf ogt, %26, %27 : vector<64x128xf32>
    %cst_13 = arith.constant 2.000000e-01 : f32
    %29 = vector.broadcast %cst_13 : f32 to vector<64x128xf32>
    %30 = arith.mulf %29, %26 : vector<64x128xf32>
    %31 = arith.select %28, %26, %30 : vector<64x128xi1>, vector<64x128xf32>
    %c0_14 = arith.constant 0 : index
    %c0_15 = arith.constant 0 : index
    %c0_16 = arith.constant 0 : index
    %32 = vector.load %arg3[%c0_14, %c0_15, %c0_16] : memref<1x64x128xf32, #tpu.memory_space<vmem>>, vector<1x64x128xf32>
    %33 = vector.shape_cast %32 : vector<1x64x128xf32> to vector<64x128xf32>
    %34 = vector.shape_cast %31 : vector<64x128xf32> to vector<1x64x128xf32>
    tpu.vector_store %arg3[%c0_14, %c0_15, %c0_16], %34 {strides = array<i32>} : memref<1x64x128xf32, #tpu.memory_space<vmem>>, vector<1x64x128xf32>,
    return
  }
  func.func @transform_0(%arg0: i32) -> (i32, i32, i32) {
    %c0_i32 = arith.constant 0 : i32
    %c0_i32_0 = arith.constant 0 : i32
    %c0_i32_1 = arith.constant 0 : i32
    return %arg0, %c0_i32, %c0_i32_0 : i32, i32, i32
  }
  func.func @transform_1(%arg0: i32) -> (i32, i32) {
    %c0_i32 = arith.constant 0 : i32
    %c0_i32_0 = arith.constant 0 : i32
    %c0_i32_1 = arith.constant 0 : i32
    return %c0_i32, %c0_i32_0 : i32, i32
  }
  func.func @transform_2(%arg0: i32) -> (i32, i32, i32) {
    %c0_i32 = arith.constant 0 : i32
    %c0_i32_0 = arith.constant 0 : i32
    %c0_i32_1 = arith.constant 0 : i32
    return %arg0, %c0_i32, %c0_i32_0 : i32, i32, i32
  }
}

</mosaic_0001>

<llo_original>
// kernel: tpu_custom_call.1
$region0: #{tpu_custom_call.1}
  #allocation0 [shape = 'u32[]', space=smem, size = 0x4, offset = 0x4, fixed_abs, tag = 'smem constant byte address 0x4 - core index']
  #allocation1 [shape = 'u32[72,128]{1,0:T(1,128)}', space=vmem, size = 0x9000, scoped, tag = 'internal scratch']
  %s0 = inlined_call_operand.vmem [shape: f32[2,72,32], index: 0, kind: input, shape index: {}]
  %s1 = inlined_call_operand.vmem [shape: f32[64,128], index: 1, kind: input, shape index: {}]
  %s2 = inlined_call_operand.hbm [shape: f32[2,64,128], index: 2, kind: output, shape index: {}]
  %s3 = sld [smem:[#allocation0]]
  $region41: #{tpu_custom_call.1} parent=0
    _
  %s5 = ssub.s32 1, %s3
  %s6 = scalar_select 0, %s5, %s3
  $region1: #{tpu_custom_call.1} parent=0
    #allocation2 [shape = 'u8[65536]{0}', space=vmem, size = 0x10000, scoped, tag = 'output window, operand 0']
    #allocation3 [shape = 's32[2]{0}', space=sflag, size = 0x8, scoped, tag = 'scoped memory for tpu_custom_call.1']
    %7 = vsyncpa [#allocation3], 0
    %s8 = scalar_lea.sflag [#allocation3], 1
    %9 = vsyncpa %s8, 0
    loop: start=0, step=1, limit=4
    $region2: #{tpu_custom_call.1} parent=1 // loop_pre_header
      _
    $region3: #{tpu_custom_call.1} parent=1 // loop_header
      %s11 = sphi 0, %s15
      %p12 = scmp.ge.s32.totalorder %s11, 4
      %s21 = sphi 0, %s23
      %s24 = sphi 0, %s21
      %s25 = sphi 0, %s24
      %s41 = sphi 0, %s25
      %s45 = sphi 0, %s45
      %s47 = sphi 0, %s45
      %s48 = sphi 0, %s47
      %s62 = sphi 0, %s48
      %s68 = sphi 0, %s70
      %s71 = sphi 0, %s68
      %s72 = sphi 0, %s71
      %s88 = sphi 0, %s72
    $region4: #{tpu_custom_call.1} parent=1 // loop_header_branch
      %14 = sbr.rel (%p12) target = $region8
    $region5: #{tpu_custom_call.1} parent=1 // loop_body
      %s16 = ssub.s32 %s11, 1
      %s17 = ssub.s32 %s11, 2
      %s18 = sadd.s32 %s11, 1
      %s19 = ssub.s32 %s11, %s18
      %p20 = scmp.eq.s32.totalorder %s19, 0
      %s22 = sadd.s32 %s21, 1
      %s23 = scalar_select %p20, %s21, %s22
      %p26 = pneg %p20
      %p27 = scmp.eq.s32.totalorder %s11, 1
      %p28 = por %p26, %p27
      %p29 = scmp.ne.s32.totalorder %s21, %s24
      %p30 = scmp.eq.s32.totalorder %s11, 0
      %p31 = por %p29, %p30
      %p32 = scmp.ne.s32.totalorder %s21, %s24
      %p33 = scmp.eq.s32.totalorder %s16, 1
      %p34 = por %p32, %p33
      %p35 = scmp.ne.s32.totalorder %s24, %s25
      %p36 = scmp.eq.s32.totalorder %s16, 0
      %p37 = por %p35, %p36
      %p38 = scmp.ne.s32.totalorder %s24, %s25
      %p39 = scmp.eq.s32.totalorder %s17, 1
      %p40 = por %p38, %p39
      %p42 = scmp.ne.s32.totalorder %s25, %s41
      %p43 = scmp.eq.s32.totalorder %s17, 0
      %p44 = por %p42, %p43
      %s46 = sadd.s32 %s45, 1
      %p49 = scmp.eq.s32.totalorder %s11, 1
      %p50 = scmp.ne.s32.totalorder %s45, %s47
      %p51 = scmp.eq.s32.totalorder %s11, 0
      %p52 = por %p50, %p51
      %p53 = scmp.ne.s32.totalorder %s45, %s47
      %p54 = scmp.eq.s32.totalorder %s16, 1
      %p55 = por %p53, %p54
      %p56 = scmp.ne.s32.totalorder %s47, %s48
      %p57 = scmp.eq.s32.totalorder %s16, 0
      %p58 = por %p56, %p57
      %p59 = scmp.ne.s32.totalorder %s47, %s48
      %p60 = scmp.eq.s32.totalorder %s17, 1
      %p61 = por %p59, %p60
      %p63 = scmp.ne.s32.totalorder %s48, %s62
      %p64 = scmp.eq.s32.totalorder %s17, 0
      %p65 = por %p63, %p64
      %s66 = ssub.s32 %s11, %s18
      %p67 = scmp.eq.s32.totalorder %s66, 0
      %s69 = sadd.s32 %s68, 1
      %s70 = scalar_select %p67, %s68, %s69
      %p73 = pneg %p67
      %p74 = scmp.eq.s32.totalorder %s11, 1
      %p75 = por %p73, %p74
      %p76 = scmp.ne.s32.totalorder %s68, %s71
      %p77 = scmp.eq.s32.totalorder %s11, 0
      %p78 = por %p76, %p77
      %p79 = scmp.ne.s32.totalorder %s68, %s71
      %p80 = scmp.eq.s32.totalorder %s16, 1
      %p81 = por %p79, %p80
      %p82 = scmp.ne.s32.totalorder %s71, %s72
      %p83 = scmp.eq.s32.totalorder %s16, 0
      %p84 = por %p82, %p83
      %p85 = scmp.ne.s32.totalorder %s71, %s72
      %p86 = scmp.eq.s32.totalorder %s17, 1
      %p87 = por %p85, %p86
      %p89 = scmp.ne.s32.totalorder %s72, %s88
      %p90 = scmp.eq.s32.totalorder %s17, 0
      %p91 = por %p89, %p90
      %p92 = scmp.le.s32.totalorder 1, %s11
      %p93 = scmp.lt.s32.totalorder %s11, 3
      %p94 = pnand %p92, %p93
      %p95 = pneg %p94
      // Predicated region
      $region9: #{tpu_custom_call.1} parent=5 // pred_check
        _
      $region10: #{tpu_custom_call.1} parent=5 // pred_check_branch
        %97 = sbr.rel (%p94) target = $region12
      $region11: #{tpu_custom_call.1} parent=5 // pred_region
        %s98 = ssub.s32 %s11, 1
        // Predicated region
        $region13: #{tpu_custom_call.1} parent=11 // pred_check
          %p99 = pneg %p58
        $region14: #{tpu_custom_call.1} parent=11 // pred_check_branch
          %101 = sbr.rel (%p99) target = $region16
        $region15: #{tpu_custom_call.1} parent=11 // pred_region
          _
        $region16: #{tpu_custom_call.1} parent=11 // pred_fallthru
          _
      $region12: #{tpu_custom_call.1} parent=5 // pred_fallthru
        _
      %p102 = scmp.lt.s32.totalorder %s11, 2
      // Predicated region
      $region17: #{tpu_custom_call.1} parent=5 // pred_check
        %p103 = pneg %p102
      $region18: #{tpu_custom_call.1} parent=5 // pred_check_branch
        %105 = sbr.rel (%p103) target = $region20
      $region19: #{tpu_custom_call.1} parent=5 // pred_region
        // Predicated region
        $region21: #{tpu_custom_call.1} parent=19 // pred_check
          %p106 = pneg %p31
        $region22: #{tpu_custom_call.1} parent=19 // pred_check_branch
          %108 = sbr.rel (%p106) target = $region24
        $region23: #{tpu_custom_call.1} parent=19 // pred_region
          %p109 = scmp.lt.s32.totalorder %s11, 1
          %s110 = scalar_select %p109, %s11, 1
          %s111 = smul.addr %s110, 9
          %s112 = smul.addr %s111, 8
          %s113 = scalar_lea.vmem %s0, %s112
        $region24: #{tpu_custom_call.1} parent=19 // pred_fallthru
          _
      $region20: #{tpu_custom_call.1} parent=5 // pred_fallthru
        _
      %p114 = scmp.le.s32.totalorder 1, %s11
      %p115 = scmp.lt.s32.totalorder %s11, 3
      %p116 = pnand %p114, %p115
      %p117 = pneg %p116
      // Predicated region
      $region25: #{tpu_custom_call.1} parent=5 // pred_check
        _
      $region26: #{tpu_custom_call.1} parent=5 // pred_check_branch
        %119 = sbr.rel (%p116) target = $region28
      $region27: #{tpu_custom_call.1} parent=5 // pred_region
        %s120 = ssub.s32 %s11, 1
        %p121 = scmp.lt.s32.totalorder %s16, 1
        %s122 = scalar_select %p121, %s16, 1
        %s123 = smul.addr %s122, 9
        %s124 = smul.addr %s123, 8
        %s125 = scalar_lea.vmem %s0, %s124
        %p126 = pneg %p37
        %p127 = pneg %p34
        %p128 = pneg %p58
        %p129 = pneg %p55
        %p130 = pneg %p84
        %p131 = pneg %p81
        %s132 = sand.u32 %s71, 1
        %s133 = scalar_lea.sflag [#allocation3], %s132
        %s134 = sand.u32 %s71, 1
        %s135 = smul.addr %s134, 64
        %s136 = scalar_lea.vmem [#allocation2], %s135
        %p137 = scmp.lt.s32.totalorder %s16, 1
        %s138 = scalar_select %p137, %s16, 1
        %s139 = smul.addr %s138, 9
        %s140 = smul.addr %s139, 8
        %s141 = scalar_lea.vmem %s0, %s140
        %v142 = vld [vmem:[%s141] sm:$0xff]
        %v143 = vld [vmem:[%s141 + $0x8] sm:$0xff]
        %v144 = vld [vmem:[%s141 + $0x10] sm:$0xff]
        %v145 = vld [vmem:[%s141 + $0x18] sm:$0xff]
        %v146 = vld [vmem:[%s141 + $0x20] sm:$0xff]
        %v147 = vld [vmem:[%s141 + $0x28] sm:$0xff]
        %v148 = vld [vmem:[%s141 + $0x30] sm:$0xff]
        %v149 = vld [vmem:[%s141 + $0x38] sm:$0xff]
        %v150 = vld [vmem:[%s141 + $0x40] sm:$0xff]
        %159 = vrot.lane.b32.xlu0 %v143, 32
        %v160 = vpop.permute.xlu0 %159
        %161 = vrot.lane.b32.xlu0 %v144, 32
        %v162 = vpop.permute.xlu0 %161
        %163 = vrot.lane.b32.xlu0 %v145, 32
        %v164 = vpop.permute.xlu0 %163
        %165 = vrot.lane.b32.xlu0 %v146, 32
        %v166 = vpop.permute.xlu0 %165
        %167 = vrot.lane.b32.xlu0 %v147, 32
        %v168 = vpop.permute.xlu0 %167
        %169 = vrot.lane.b32.xlu0 %v148, 32
        %v170 = vpop.permute.xlu0 %169
        %171 = vrot.lane.b32.xlu0 %v149, 32
        %v172 = vpop.permute.xlu0 %171
        %173 = vrot.lane.b32.xlu0 %v150, 32
        %v174 = vpop.permute.xlu0 %173
        %vm183 = vcmask 261120
        %v184 = vsel %vm183, %v142, %v160
        %v185 = vsel %vm183, %v143, %v162
        %v186 = vsel %vm183, %v144, %v164
        %v187 = vsel %vm183, %v145, %v166
        %v188 = vsel %vm183, %v146, %v168
        %v189 = vsel %vm183, %v147, %v170
        %v190 = vsel %vm183, %v148, %v172
        %v191 = vsel %vm183, %v149, %v174
        %v192 = vld [vmem:[%s1] sm:$0xff]
        %v193 = vld [vmem:[%s1 + $0x8] sm:$0xff]
        %v194 = vld [vmem:[%s1 + $0x10] sm:$0xff]
        %v195 = vld [vmem:[%s1 + $0x18] sm:$0xff]
        %v196 = vld [vmem:[%s1 + $0x20] sm:$0xff]
        %v197 = vld [vmem:[%s1 + $0x28] sm:$0xff]
        %v198 = vld [vmem:[%s1 + $0x30] sm:$0xff]
        %v199 = vld [vmem:[%s1 + $0x38] sm:$0xff]
        %vm200 = vcmask 523264
        %v202 = vsel %vm200, %v184, 0
        %v205 = vsel %vm200, %v185, 0
        %v208 = vsel %vm200, %v186, 0
        %v211 = vsel %vm200, %v187, 0
        %v214 = vsel %vm200, %v188, 0
        %v217 = vsel %vm200, %v189, 0
        %v220 = vsel %vm200, %v190, 0
        %v223 = vsel %vm200, %v191, 0
        %225 = vmatpush.msra.mxu0 0.0
        %226 = vmatpush.msra.mxu0 0.0
        %227 = vmatpush.msra.mxu0 0.0
        %228 = vmatpush.msra.mxu0 0.0
        %229 = vmatpush.msra.mxu0 0.0
        %230 = vmatpush.msra.mxu0 0.0
        %231 = vmatpush.msra.mxu0 0.0
        %232 = vmatpush.msra.mxu0 0.0
        %233 = vmatpush.msra.mxu0 %v199
        %234 = vmatpush.msra.mxu0 %v198
        %235 = vmatpush.msra.mxu0 %v197
        %236 = vmatpush.msra.mxu0 %v196
        %237 = vmatpush.msra.mxu0 %v195
        %238 = vmatpush.msra.mxu0 %v194
        %239 = vmatpush.msra.mxu0 %v193
        %240 = vmatpush.msra.mxu0 %v192
        %241 = vmatmul.f32.gmra.mxu0 %v202
        %v242 = vpop.f32.mrf.mxu0
        %v243 = vadd.f32 0.0, %v242
        %244 = vmatmul.f32.gmra.mxu0 %v205
        %v245 = vpop.f32.mrf.mxu0
        %v246 = vadd.f32 0.0, %v245
        %247 = vmatmul.f32.gmra.mxu0 %v208
        %v248 = vpop.f32.mrf.mxu0
        %v249 = vadd.f32 0.0, %v248
        %250 = vmatmul.f32.gmra.mxu0 %v211
        %v251 = vpop.f32.mrf.mxu0
        %v252 = vadd.f32 0.0, %v251
        %253 = vmatmul.f32.gmra.mxu0 %v214
        %v254 = vpop.f32.mrf.mxu0
        %v255 = vadd.f32 0.0, %v254
        %256 = vmatmul.f32.gmra.mxu0 %v217
        %v257 = vpop.f32.mrf.mxu0
        %v258 = vadd.f32 0.0, %v257
        %259 = vmatmul.f32.gmra.mxu0 %v220
        %v260 = vpop.f32.mrf.mxu0
        %v261 = vadd.f32 0.0, %v260
        %262 = vmatmul.f32.gmra.mxu0 %v223
        %v263 = vpop.f32.mrf.mxu0
        %v264 = vadd.f32 0.0, %v263
        %265 = vdwg.mxu0
        %v266 = vadd.f32 %v243, %v246
        %v267 = vadd.f32 %v266, %v249
        %v268 = vadd.f32 %v267, %v252
        %v269 = vadd.f32 %v268, %v255
        %v270 = vadd.f32 %v269, %v258
        %v271 = vadd.f32 %v270, %v261
        %v272 = vadd.f32 %v271, %v264
        %v273 = vrot.slane %v272, 4
        %v274 = vadd.f32 %v272, %v273
        %v275 = vrot.slane %v274, 2
        %v276 = vadd.f32 %v274, %v275
        %v277 = vrot.slane %v276, 1
        %v278 = vadd.f32 %v276, %v277
        %v279 = vmul.f32 %v243, %v243
        %v280 = vmul.f32 %v246, %v246
        %v281 = vmul.f32 %v249, %v249
        %v282 = vmul.f32 %v252, %v252
        %v283 = vmul.f32 %v255, %v255
        %v284 = vmul.f32 %v258, %v258
        %v285 = vmul.f32 %v261, %v261
        %v286 = vmul.f32 %v264, %v264
        %v287 = vadd.f32 %v279, %v280
        %v288 = vadd.f32 %v287, %v281
        %v289 = vadd.f32 %v288, %v282
        %v290 = vadd.f32 %v289, %v283
        %v291 = vadd.f32 %v290, %v284
        %v292 = vadd.f32 %v291, %v285
        %v293 = vadd.f32 %v292, %v286
        %v294 = vrot.slane %v293, 4
        %v295 = vadd.f32 %v293, %v294
        %v296 = vrot.slane %v295, 2
        %v297 = vadd.f32 %v295, %v296
        %v298 = vrot.slane %v297, 1
        %v299 = vadd.f32 %v297, %v298
        %v300 = vmul.f32 %v278, 0.015625
        %v301 = vmul.f32 %v299, 0.015625
        %v302 = vmul.f32 %v300, %v300
        %v303 = vsub.f32 %v301, %v302
        %v304 = vmax.f32 %v303, 0.0
        %v305 = vsub.f32 %v243, %v300
        %v306 = vsub.f32 %v246, %v300
        %v307 = vsub.f32 %v249, %v300
        %v308 = vsub.f32 %v252, %v300
        %v309 = vsub.f32 %v255, %v300
        %v310 = vsub.f32 %v258, %v300
        %v311 = vsub.f32 %v261, %v300
        %v312 = vsub.f32 %v264, %v300
        %v313 = vadd.f32 %v304, 1e-05
        %v314 = vrsqrt.pop %v313
        %v315 = vmul.f32 %v314, %v313
        %v316 = vmul.f32 %v315, %v314
        %v317 = vmul.f32 0.5, %v316
        %v318 = vsub.f32 1.5, %v317
        %v319 = vmul.f32 %v314, %v318
        %vm320 = vweird.f32 %v313
        %vm321 = vweird.f32 %v314
        %vm322 = vmor %vm320, %vm321
        %v323 = vsel %vm322, %v314, %v319
        %v324 = vmul.f32 %v305, %v323
        %v325 = vmul.f32 %v306, %v323
        %v326 = vmul.f32 %v307, %v323
        %v327 = vmul.f32 %v308, %v323
        %v328 = vmul.f32 %v309, %v323
        %v329 = vmul.f32 %v310, %v323
        %v330 = vmul.f32 %v311, %v323
        %v331 = vmul.f32 %v312, %v323
        %vm332 = vcmp.gt.f32.partialorder %v324, 0.0
        %vm333 = vcmp.gt.f32.partialorder %v325, 0.0
        %vm334 = vcmp.gt.f32.partialorder %v326, 0.0
        %vm335 = vcmp.gt.f32.partialorder %v327, 0.0
        %vm336 = vcmp.gt.f32.partialorder %v328, 0.0
        %vm337 = vcmp.gt.f32.partialorder %v329, 0.0
        %vm338 = vcmp.gt.f32.partialorder %v330, 0.0
        %vm339 = vcmp.gt.f32.partialorder %v331, 0.0
        %v340 = vmul.f32 %v324, 0.2
        %v341 = vmul.f32 %v325, 0.2
        %v342 = vmul.f32 %v326, 0.2
        %v343 = vmul.f32 %v327, 0.2
        %v344 = vmul.f32 %v328, 0.2
        %v345 = vmul.f32 %v329, 0.2
        %v346 = vmul.f32 %v330, 0.2
        %v347 = vmul.f32 %v331, 0.2
        %v348 = vsel %vm332, %v324, %v340
        %v349 = vsel %vm333, %v325, %v341
        %v350 = vsel %vm334, %v326, %v342
        %v351 = vsel %vm335, %v327, %v343
        %v352 = vsel %vm336, %v328, %v344
        %v353 = vsel %vm337, %v329, %v345
        %v354 = vsel %vm338, %v330, %v346
        %v355 = vsel %vm339, %v331, %v347
        %356 = vst [vmem:[%s136] sm:$0xff] %v348
        %357 = vst [vmem:[%s136 + $0x8] sm:$0xff] %v349
        %358 = vst [vmem:[%s136 + $0x10] sm:$0xff] %v350
        %359 = vst [vmem:[%s136 + $0x18] sm:$0xff] %v351
        %360 = vst [vmem:[%s136 + $0x20] sm:$0xff] %v352
        %361 = vst [vmem:[%s136 + $0x28] sm:$0xff] %v353
        %362 = vst [vmem:[%s136 + $0x30] sm:$0xff] %v354
        %363 = vst [vmem:[%s136 + $0x38] sm:$0xff] %v355
        %s364 = sand.u32 %s71, 1
        %s365 = scalar_lea.sflag [#allocation3], %s364
        %s366 = sand.u32 %s71, 1
        %s367 = smul.addr %s366, 64
        %s368 = scalar_lea.vmem [#allocation2], %s367
        // Predicated region
        $region29: #{tpu_custom_call.1} parent=27 // pred_check
          %p369 = pneg %p81
        $region30: #{tpu_custom_call.1} parent=27 // pred_check_branch
          %371 = sbr.rel (%p369) target = $region32
        $region31: #{tpu_custom_call.1} parent=27 // pred_region
          %373 = vsyncadd %s365, 0
          %s374 = smul.addr %s16, 8
          %s375 = smul.addr %s374, 8
          %s376 = scalar_lea.hbm %s2, %s375
          %s377 = sshll.u32 %s368, 4
          %s378 = int_to_ptr.vmem [resolvable:$true] %s377
          %s379 = sshll.u32 %s376, 4
          %s380 = int_to_ptr.hbm [resolvable:$true] %s379
          %385 = dma.vmem_to_hbm [thread:$0]  %s378, 1024, %s380, %s365, 128, 128, 8
        $region32: #{tpu_custom_call.1} parent=27 // pred_fallthru
          _
      $region28: #{tpu_custom_call.1} parent=5 // pred_fallthru
        _
      %p386 = scmp.le.s32.totalorder 2, %s11
      // Predicated region
      $region33: #{tpu_custom_call.1} parent=5 // pred_check
        %p387 = pneg %p386
      $region34: #{tpu_custom_call.1} parent=5 // pred_check_branch
        %389 = sbr.rel (%p387) target = $region36
      $region35: #{tpu_custom_call.1} parent=5 // pred_region
        %s390 = ssub.s32 %s11, 2
        // Predicated region
        $region37: #{tpu_custom_call.1} parent=35 // pred_check
          %p391 = pneg %p87
        $region38: #{tpu_custom_call.1} parent=35 // pred_check_branch
          %393 = sbr.rel (%p391) target = $region40
        $region39: #{tpu_custom_call.1} parent=35 // pred_region
          %s394 = sand.u32 %s72, 1
          %s395 = scalar_lea.sflag [#allocation3], %s394
          %s396 = sand.u32 %s72, 1
          %s397 = smul.addr %s396, 64
          %s398 = scalar_lea.vmem [#allocation2], %s397
          %400 = dma.done %s395, 1024
        $region40: #{tpu_custom_call.1} parent=35 // pred_fallthru
          _
      $region36: #{tpu_custom_call.1} parent=5 // pred_fallthru
        _
    $region6: #{tpu_custom_call.1} parent=1 // loop_footer
      %s15 = sadd.s32 1, %s11
    $region7: #{tpu_custom_call.1} parent=1 // loop_footer_branch
      %10 = sbr.rel target = $region3
    $region8: #{tpu_custom_call.1} parent=1 // loop_exit
      _
    %401 = vsyncpa [#allocation3], 1
    %s402 = scalar_lea.sflag [#allocation3], 1
    %403 = vsyncpa %s402, 1

</llo_original>
